<compile_context>
chip_gen: v5e
topology: v5e:2x2
jax: 0.10.0
libtpu: 0.0.40
codegen_flags: <defaults>
</compile_context>

<pallas_src>
import jax
import jax.numpy as jnp
from jax import lax
from jax.experimental import pallas as pl
from jax.experimental.pallas import tpu as pltpu


def tabr_kernel(R_ref, w1_ref, b1_ref, w2t_ref, b2_ref,
                wr1_ref, br1_ref, wr2_ref, br2_ref,
                t_ref, r_ref):
    # R_ref: (T, d) for the current batch element (leading grid dim squeezed).
    R = R_ref[...]                                                     # (T, d)

    # --- mlp_tatt: Linear(d, d//2) -> ReLU ---
    h = jnp.dot(R, w1_ref[...], preferred_element_type=jnp.float32)   # (T, h)
    h = jnp.maximum(h + b1_ref[...], 0.0)

    # --- Linear(d//2, 1), computed lane-dense as a (1, T) row:
    #     r_row = w2^T @ h^T  ==  NT matmul (contract last dims), q@k^T style.
    r = lax.dot_general(w2t_ref[...], h,                               # (1, T)
                        dimension_numbers=(((1,), (1,)), ((), ())),
                        preferred_element_type=jnp.float32)
    r = r + b2_ref[...]                                                # (1, T)
    r_ref[...] = r

    # --- softmax over the T axis (lane axis in this layout) ---
    m = jnp.max(r, axis=-1, keepdims=True)                             # (1, 1)
    e = jnp.exp(r - m)                                                 # (1, T)
    s = jnp.sum(e, axis=-1, keepdims=True)                             # (1, 1)

    # --- temporal attention pooling on the MXU: v = (e @ R) / sum(e) ---
    v = jnp.dot(e, R, preferred_element_type=jnp.float32)              # (1, d)
    v = v * pl.reciprocal(s, approx=True)                              # EUP slot

    # --- mlp_reg: Linear(d, d) -> ReLU -> Linear(d, 2) ---
    g = jnp.dot(v, wr1_ref[...], preferred_element_type=jnp.float32)   # (1, d)
    g = jnp.maximum(g + br1_ref[...], 0.0)
    t = jnp.dot(g, wr2_ref[...], preferred_element_type=jnp.float32)   # (1, 2)
    t_ref[...] = t + br2_ref[...]


def _resident_spec(x):
    """Full-array block with a constant index_map -> stays in VMEM across grid."""
    return pl.BlockSpec(x.shape, lambda b, _nd=x.ndim: (0,) * _nd)


@jax.jit
def tabr_forward_batched(Rb, params):
    """Rb: (B, T, d) float32 -> (t: (B, 2), r: (B, T, 1))."""
    B, T, d = Rb.shape
    w1, b1, w2t, b2, wr1, br1, wr2, br2 = params

    t_out, r_out = pl.pallas_call(
        tabr_kernel,
        out_shape=(
            jax.ShapeDtypeStruct((B, 1, 2), jnp.float32),   # t rows
            jax.ShapeDtypeStruct((B, 1, T), jnp.float32),   # r rows (lane-dense)
        ),
        grid_spec=pltpu.PrefetchScalarGridSpec(
            num_scalar_prefetch=0,
            grid=(B,),
            in_specs=[
                # One (T, d) sequence per grid step; batch dim squeezed away.
                pl.BlockSpec((None, T, d), lambda b: (b, 0, 0)),
                # Weights / biases: constant block index -> VMEM-resident.
                _resident_spec(w1), _resident_spec(b1),
                _resident_spec(w2t), _resident_spec(b2),
                _resident_spec(wr1), _resident_spec(br1),
                _resident_spec(wr2), _resident_spec(br2),
            ],
            out_specs=(
                pl.BlockSpec((None, 1, 2), lambda b: (b, 0, 0)),
                pl.BlockSpec((None, 1, T), lambda b: (b, 0, 0)),
            ),
        ),
        compiler_params=pltpu.CompilerParams(
            dimension_semantics=("parallel",)),
    )(Rb, w1, b1, w2t, b2, wr1, br1, wr2, br2)

    t = t_out[:, 0, :]                       # (B, 2)
    r = jnp.transpose(r_out, (0, 2, 1))      # (B, T, 1)  (module's layout)
    return t, r


def tabr_forward(R, params):
    """Single-sequence API matching the PyTorch module.  R: (T, d)."""
    t, r = tabr_forward_batched(R[None], params)
    return t[0], r[0]


def init_params(key, d):
    """Deterministic synthetic init.
    w1/wr1/wr2 stored as (in, out); w2 stored in PyTorch (out=1, in=h) layout
    so the kernel can do the NT matmul directly; biases as (1, out)."""
    ks = jax.random.split(key, 4)
    h = d // 2

    def lin(k, fan_in, fan_out):
        kw, kb = jax.random.split(k)
        bound = 1.0 / jnp.sqrt(fan_in)
        w = jax.random.uniform(kw, (fan_in, fan_out), jnp.float32, -bound, bound)
        b = jax.random.uniform(kb, (1, fan_out), jnp.float32, -bound, bound)
        return w, b

    w1, b1 = lin(ks[0], d, h)        # mlp_tatt[0]: Linear(d, d//2)
    w2, b2 = lin(ks[1], h, 1)        # mlp_tatt[2]: Linear(d//2, 1)
    wr1, br1 = lin(ks[2], d, d)      # mlp_reg[0]:  Linear(d, d)
    wr2, br2 = lin(ks[3], d, 2)      # mlp_reg[2]:  Linear(d, 2)
    w2t = w2.T                        # (1, h) -- row layout for the kernel
    return (w1, b1, w2t, b2, wr1, br1, wr2, br2)


def tabr_reference(R, params):
    """Pure-JAX reference (exact arithmetic) for correctness checking."""
    w1, b1, w2t, b2, wr1, br1, wr2, br2 = params
    r = jnp.maximum(R @ w1 + b1, 0.0) @ w2t.T + b2      # (T, 1)
    o = jax.nn.softmax(r, axis=0)
    v = jnp.sum(o * R, axis=0, keepdims=True)           # (1, d)
    t = jnp.maximum(v @ wr1 + br1, 0.0) @ wr2 + br2     # (1, 2)
    return t[0], r


if __name__ == "__main__":
    B, T, d = 4, 8, 32
    key = jax.random.PRNGKey(0)
    k_inp, k_par = jax.random.split(key)

    Rb = jax.random.normal(k_inp, (B, T, d), dtype=jnp.float32)
    params = init_params(k_par, d)

    # Batched kernel run.
    t_b, r_b = tabr_forward_batched(Rb, params)
    jax.block_until_ready((t_b, r_b))

    # Reference (vmapped over the batch).
    t_ref_b, r_ref_b = jax.vmap(lambda R: tabr_reference(R, params))(Rb)

    assert t_b.shape == (B, 2) and r_b.shape == (B, T, 1)
    # r never touches the approx reciprocal -> tight tolerance.
    assert jnp.allclose(r_b, r_ref_b, atol=1e-5, rtol=1e-5)
    # t goes through the EUP approx reciprocal in the softmax normalization
    # -> slightly looser tolerance.
    assert jnp.allclose(t_b, t_ref_b, atol=5e-3, rtol=5e-3)

    # Single-sequence API (matches the PyTorch module's forward signature).
    t1, r1 = tabr_forward(Rb[0], params)
    jax.block_until_ready((t1, r1))
    assert t1.shape == (2,) and r1.shape == (T, 1)
    assert jnp.allclose(r1, r_ref_b[0], atol=1e-5, rtol=1e-5)
    assert jnp.allclose(t1, t_ref_b[0], atol=5e-3, rtol=5e-3)

    print("KERNEL_OK")
</pallas_src>

<mosaic_0001>
module attributes {stable_mosaic.version = 11 : i64} {
  func.func @tabr_kernel(%arg0: i32, %arg1: memref<1x8x32xf32, #tpu.memory_space<vmem>>, %arg2: memref<32x16xf32, #tpu.memory_space<vmem>>, %arg3: memref<1x16xf32, #tpu.memory_space<vmem>>, %arg4: memref<1x16xf32, #tpu.memory_space<vmem>>, %arg5: memref<1x1xf32, #tpu.memory_space<vmem>>, %arg6: memref<32x32xf32, #tpu.memory_space<vmem>>, %arg7: memref<1x32xf32, #tpu.memory_space<vmem>>, %arg8: memref<32x2xf32, #tpu.memory_space<vmem>>, %arg9: memref<1x2xf32, #tpu.memory_space<vmem>>, %arg10: memref<1x1x2xf32, #tpu.memory_space<vmem>>, %arg11: memref<1x1x8xf32, #tpu.memory_space<vmem>>) attributes {dimension_semantics = [#tpu.dimension_semantics<parallel>], iteration_bounds = array<i64: 4>, scalar_prefetch = 0 : i64, scratch_operands = 0 : i64, tpu.core_type = #tpu.core_type<tc>, window_params = [{transform_indices = @transform_0, window_bounds = array<i64: 1, 8, 32>}, {pipeline_mode = #tpu.pipeline_mode<synchronous>, transform_indices = @transform_1, window_bounds = array<i64: 32, 16>}, {pipeline_mode = #tpu.pipeline_mode<synchronous>, transform_indices = @transform_2, window_bounds = array<i64: 1, 16>}, {pipeline_mode = #tpu.pipeline_mode<synchronous>, transform_indices = @transform_3, window_bounds = array<i64: 1, 16>}, {pipeline_mode = #tpu.pipeline_mode<synchronous>, transform_indices = @transform_4, window_bounds = array<i64: 1, 1>}, {pipeline_mode = #tpu.pipeline_mode<synchronous>, transform_indices = @transform_5, window_bounds = array<i64: 32, 32>}, {pipeline_mode = #tpu.pipeline_mode<synchronous>, transform_indices = @transform_6, window_bounds = array<i64: 1, 32>}, {pipeline_mode = #tpu.pipeline_mode<synchronous>, transform_indices = @transform_7, window_bounds = array<i64: 32, 2>}, {pipeline_mode = #tpu.pipeline_mode<synchronous>, transform_indices = @transform_8, window_bounds = array<i64: 1, 2>}, {transform_indices = @transform_9, window_bounds = array<i64: 1, 1, 2>}, {transform_indices = @transform_10, window_bounds = array<i64: 1, 1, 8>}]} {
    %c0 = arith.constant 0 : index
    %c0_0 = arith.constant 0 : index
    %c0_1 = arith.constant 0 : index
    %0 = vector.load %arg1[%c0, %c0_0, %c0_1] : memref<1x8x32xf32, #tpu.memory_space<vmem>>, vector<1x8x32xf32>
    %1 = vector.shape_cast %0 : vector<1x8x32xf32> to vector<8x32xf32>
    %c0_2 = arith.constant 0 : index
    %c0_3 = arith.constant 0 : index
    %2 = vector.load %arg2[%c0_2, %c0_3] : memref<32x16xf32, #tpu.memory_space<vmem>>, vector<32x16xf32>
    %cst = arith.constant dense<0.000000e+00> : vector<8x16xf32>
    %3 = tpu.matmul %1, %2, %cst {dimension_numbers = #tpu.dot_dimension_numbers<[1], [0], [0], [1], [0, 0, 1, 1], [], []>} : vector<8x32xf32>, vector<32x16xf32>, vector<8x16xf32> -> vector<8x16xf32>
    %c0_4 = arith.constant 0 : index
    %c0_5 = arith.constant 0 : index
    %4 = vector.load %arg3[%c0_4, %c0_5] : memref<1x16xf32, #tpu.memory_space<vmem>>, vector<1x16xf32>
    %5 = vector.broadcast %4 : vector<1x16xf32> to vector<8x16xf32>
    %6 = arith.addf %3, %5 : vector<8x16xf32>
    %cst_6 = arith.constant 0.000000e+00 : f32
    %7 = vector.broadcast %cst_6 : f32 to vector<8x16xf32>
    %8 = arith.maximumf %6, %7 : vector<8x16xf32>
    %c0_7 = arith.constant 0 : index
    %c0_8 = arith.constant 0 : index
    %9 = vector.load %arg4[%c0_7, %c0_8] : memref<1x16xf32, #tpu.memory_space<vmem>>, vector<1x16xf32>
    %cst_9 = arith.constant dense<0.000000e+00> : vector<1x8xf32>
    %10 = tpu.matmul %9, %8, %cst_9 {dimension_numbers = #tpu.dot_dimension_numbers<[1], [1], [0], [0], [0, 0, 1, 0], [], []>} : vector<1x16xf32>, vector<8x16xf32>, vector<1x8xf32> -> vector<1x8xf32>
    %c0_10 = arith.constant 0 : index
    %c0_11 = arith.constant 0 : index
    %11 = vector.load %arg5[%c0_10, %c0_11] : memref<1x1xf32, #tpu.memory_space<vmem>>, vector<1x1xf32>
    %12 = vector.broadcast %11 : vector<1x1xf32> to vector<1x8xf32>
    %13 = arith.addf %10, %12 : vector<1x8xf32>
    %c0_12 = arith.constant 0 : index
    %c0_13 = arith.constant 0 : index
    %c0_14 = arith.constant 0 : index
    %14 = vector.load %arg11[%c0_12, %c0_13, %c0_14] : memref<1x1x8xf32, #tpu.memory_space<vmem>>, vector<1x1x8xf32>
    %15 = vector.shape_cast %14 : vector<1x1x8xf32> to vector<1x8xf32>
    %16 = vector.shape_cast %13 : vector<1x8xf32> to vector<1x1x8xf32>
    tpu.vector_store %arg11[%c0_12, %c0_13, %c0_14], %16 {strides = array<i32>} : memref<1x1x8xf32, #tpu.memory_space<vmem>>, vector<1x1x8xf32>,
    %cst_15 = arith.constant dense<0xFF800000> : vector<1xf32>
    %17 = vector.multi_reduction <maximumf>, %13, %cst_15 [1] : vector<1x8xf32> to vector<1xf32>
    %18 = vector.shape_cast %17 : vector<1xf32> to vector<1x1xf32>
    %19 = vector.broadcast %18 : vector<1x1xf32> to vector<1x8xf32>
    %20 = arith.subf %13, %19 : vector<1x8xf32>
    %21 = math.exp %20 : vector<1x8xf32>
    %cst_16 = arith.constant dense<0.000000e+00> : vector<1xf32>
    %22 = vector.multi_reduction <add>, %21, %cst_16 [1] : vector<1x8xf32> to vector<1xf32>
    %23 = vector.shape_cast %22 : vector<1xf32> to vector<1x1xf32>
    %cst_17 = arith.constant dense<0.000000e+00> : vector<1x32xf32>
    %24 = tpu.matmul %21, %1, %cst_17 {dimension_numbers = #tpu.dot_dimension_numbers<[1], [0], [0], [1], [0, 0, 1, 1], [], []>} : vector<1x8xf32>, vector<8x32xf32>, vector<1x32xf32> -> vector<1x32xf32>
    %25 = tpu.reciprocal %23 {approx = true} : vector<1x1xf32> -> vector<1x1xf32>
    %26 = vector.broadcast %25 : vector<1x1xf32> to vector<1x32xf32>
    %27 = arith.mulf %24, %26 : vector<1x32xf32>
    %c0_18 = arith.constant 0 : index
    %c0_19 = arith.constant 0 : index
    %28 = vector.load %arg6[%c0_18, %c0_19] : memref<32x32xf32, #tpu.memory_space<vmem>>, vector<32x32xf32>
    %cst_20 = arith.constant dense<0.000000e+00> : vector<1x32xf32>
    %29 = tpu.matmul %27, %28, %cst_20 {dimension_numbers = #tpu.dot_dimension_numbers<[1], [0], [0], [1], [0, 0, 1, 1], [], []>} : vector<1x32xf32>, vector<32x32xf32>, vector<1x32xf32> -> vector<1x32xf32>
    %c0_21 = arith.constant 0 : index
    %c0_22 = arith.constant 0 : index
    %30 = vector.load %arg7[%c0_21, %c0_22] : memref<1x32xf32, #tpu.memory_space<vmem>>, vector<1x32xf32>
    %31 = arith.addf %29, %30 : vector<1x32xf32>
    %cst_23 = arith.constant 0.000000e+00 : f32
    %32 = vector.broadcast %cst_23 : f32 to vector<1x32xf32>
    %33 = arith.maximumf %31, %32 : vector<1x32xf32>
    %c0_24 = arith.constant 0 : index
    %c0_25 = arith.constant 0 : index
    %34 = vector.load %arg8[%c0_24, %c0_25] : memref<32x2xf32, #tpu.memory_space<vmem>>, vector<32x2xf32>
    %cst_26 = arith.constant dense<0.000000e+00> : vector<1x2xf32>
    %35 = tpu.matmul %33, %34, %cst_26 {dimension_numbers = #tpu.dot_dimension_numbers<[1], [0], [0], [1], [0, 0, 1, 1], [], []>} : vector<1x32xf32>, vector<32x2xf32>, vector<1x2xf32> -> vector<1x2xf32>
    %c0_27 = arith.constant 0 : index
    %c0_28 = arith.constant 0 : index
    %36 = vector.load %arg9[%c0_27, %c0_28] : memref<1x2xf32, #tpu.memory_space<vmem>>, vector<1x2xf32>
    %37 = arith.addf %35, %36 : vector<1x2xf32>
    %c0_29 = arith.constant 0 : index
    %c0_30 = arith.constant 0 : index
    %c0_31 = arith.constant 0 : index
    %38 = vector.load %arg10[%c0_29, %c0_30, %c0_31] : memref<1x1x2xf32, #tpu.memory_space<vmem>>, vector<1x1x2xf32>
    %39 = vector.shape_cast %38 : vector<1x1x2xf32> to vector<1x2xf32>
    %40 = vector.shape_cast %37 : vector<1x2xf32> to vector<1x1x2xf32>
    tpu.vector_store %arg10[%c0_29, %c0_30, %c0_31], %40 {strides = array<i32>} : memref<1x1x2xf32, #tpu.memory_space<vmem>>, vector<1x1x2xf32>,
    return
  }
  func.func @transform_0(%arg0: i32) -> (i32, i32, i32) {
    %c0_i32 = arith.constant 0 : i32
    %c0_i32_0 = arith.constant 0 : i32
    %c0_i32_1 = arith.constant 0 : i32
    return %arg0, %c0_i32, %c0_i32_0 : i32, i32, i32
  }
  func.func @transform_1(%arg0: i32) -> (i32, i32) {
    %c0_i32 = arith.constant 0 : i32
    %c0_i32_0 = arith.constant 0 : i32
    %c0_i32_1 = arith.constant 0 : i32
    return %c0_i32, %c0_i32_0 : i32, i32
  }
  func.func @transform_2(%arg0: i32) -> (i32, i32) {
    %c0_i32 = arith.constant 0 : i32
    %c0_i32_0 = arith.constant 0 : i32
    %c0_i32_1 = arith.constant 0 : i32
    return %c0_i32, %c0_i32_0 : i32, i32
  }
  func.func @transform_3(%arg0: i32) -> (i32, i32) {
    %c0_i32 = arith.constant 0 : i32
    %c0_i32_0 = arith.constant 0 : i32
    %c0_i32_1 = arith.constant 0 : i32
    return %c0_i32, %c0_i32_0 : i32, i32
  }
  func.func @transform_4(%arg0: i32) -> (i32, i32) {
    %c0_i32 = arith.constant 0 : i32
    %c0_i32_0 = arith.constant 0 : i32
    %c0_i32_1 = arith.constant 0 : i32
    return %c0_i32, %c0_i32_0 : i32, i32
  }
  func.func @transform_5(%arg0: i32) -> (i32, i32) {
    %c0_i32 = arith.constant 0 : i32
    %c0_i32_0 = arith.constant 0 : i32
    %c0_i32_1 = arith.constant 0 : i32
    return %c0_i32, %c0_i32_0 : i32, i32
  }
  func.func @transform_6(%arg0: i32) -> (i32, i32) {
    %c0_i32 = arith.constant 0 : i32
    %c0_i32_0 = arith.constant 0 : i32
    %c0_i32_1 = arith.constant 0 : i32
    return %c0_i32, %c0_i32_0 : i32, i32
  }
  func.func @transform_7(%arg0: i32) -> (i32, i32) {
    %c0_i32 = arith.constant 0 : i32
    %c0_i32_0 = arith.constant 0 : i32
    %c0_i32_1 = arith.constant 0 : i32
    return %c0_i32, %c0_i32_0 : i32, i32
  }
  func.func @transform_8(%arg0: i32) -> (i32, i32) {
    %c0_i32 = arith.constant 0 : i32
    %c0_i32_0 = arith.constant 0 : i32
    %c0_i32_1 = arith.constant 0 : i32
    return %c0_i32, %c0_i32_0 : i32, i32
  }
  func.func @transform_9(%arg0: i32) -> (i32, i32, i32) {
    %c0_i32 = arith.constant 0 : i32
    %c0_i32_0 = arith.constant 0 : i32
    %c0_i32_1 = arith.constant 0 : i32
    return %arg0, %c0_i32, %c0_i32_0 : i32, i32, i32
  }
  func.func @transform_10(%arg0: i32) -> (i32, i32, i32) {
    %c0_i32 = arith.constant 0 : i32
    %c0_i32_0 = arith.constant 0 : i32
    %c0_i32_1 = arith.constant 0 : i32
    return %arg0, %c0_i32, %c0_i32_0 : i32, i32, i32
  }
}

</mosaic_0001>

<llo_original>
// kernel: tabr_forward_batched.1
$region0: #{tabr_forward_batched.1}
  #allocation0 [shape = 'u32[]', space=smem, size = 0x4, offset = 0x4, fixed_abs, tag = 'smem constant byte address 0x4 - core index']
  #allocation1 [shape = 'u32[72,128]{1,0:T(1,128)}', space=vmem, size = 0x9000, scoped, tag = 'internal scratch']
  #allocation2 [shape = 'f32[1,1]{1,0:T(1,128)S(1)}', space=vmem, size = 0x200, scoped, tag = 'scoped memory for tabr_forward_batched.1']
  %s0 = inlined_call_operand.vmem [shape: f32[4,8,32], index: 0, kind: input, shape index: {}]
  %s1 = inlined_call_operand.vmem [shape: f32[32,16], index: 1, kind: input, shape index: {}]
  %s2 = inlined_call_operand.vmem [shape: f32[1,16], index: 2, kind: input, shape index: {}]
  %s3 = inlined_call_operand.vmem [shape: f32[1,16], index: 3, kind: input, shape index: {}]
  %s4 = inlined_call_operand.<no memory space> [shape: f32[1,1], index: 4, kind: input, shape index: {}]
  %s5 = inlined_call_operand.vmem [shape: f32[32,32], index: 5, kind: input, shape index: {}]
  %s6 = inlined_call_operand.vmem [shape: f32[1,32], index: 6, kind: input, shape index: {}]
  %s7 = inlined_call_operand.vmem [shape: f32[32,2], index: 7, kind: input, shape index: {}]
  %s8 = inlined_call_operand.vmem [shape: f32[1,2], index: 8, kind: input, shape index: {}]
  %s9 = inlined_call_operand.vmem [shape: f32[4,1,2], index: 9, kind: output, shape index: {0}]
  %s10 = inlined_call_operand.hbm [shape: f32[4,1,8], index: 10, kind: output, shape index: {1}]
  %11 = xla_tuple %s9, %s10
  %s12 = sld [smem:[#allocation0]]
  $region77: #{tabr_forward_batched.1} parent=0
    _
  %s14 = ssub.s32 1, %s12
  %s15 = scalar_select 0, %s14, %s12
  %v16 = vstv %s4
  %17 = vst [vmem:[#allocation2] sm:$0x1] %v16
  $region1: #{tabr_forward_batched.1} parent=0
    #allocation3 [shape = 'u8[1024]{0}', space=vmem, size = 0x400, scoped, tag = 'output window, operand 1']
    #allocation4 [shape = 's32[2]{0}', space=sflag, size = 0x8, scoped, tag = 'scoped memory for tabr_forward_batched.1']
    %18 = vsyncpa [#allocation4], 0
    %s19 = scalar_lea.sflag [#allocation4], 1
    %20 = vsyncpa %s19, 0
    loop: start=0, step=1, limit=6
    $region2: #{tabr_forward_batched.1} parent=1 // loop_pre_header
      _
    $region3: #{tabr_forward_batched.1} parent=1 // loop_header
      %s22 = sphi 0, %s26
      %p23 = scmp.ge.s32.totalorder %s22, 6
      %s32 = sphi 0, %s34
      %s35 = sphi 0, %s32
      %s36 = sphi 0, %s35
      %s52 = sphi 0, %s36
      %s56 = sphi 0, %s56
      %s58 = sphi 0, %s56
      %s59 = sphi 0, %s58
      %s73 = sphi 0, %s59
      %s77 = sphi 0, %s77
      %s79 = sphi 0, %s77
      %s80 = sphi 0, %s79
      %s94 = sphi 0, %s80
      %s98 = sphi 0, %s98
      %s100 = sphi 0, %s98
      %s101 = sphi 0, %s100
      %s115 = sphi 0, %s101
      %s119 = sphi 0, %s119
      %s121 = sphi 0, %s119
      %s122 = sphi 0, %s121
      %s136 = sphi 0, %s122
      %s140 = sphi 0, %s140
      %s142 = sphi 0, %s140
      %s143 = sphi 0, %s142
      %s157 = sphi 0, %s143
      %s161 = sphi 0, %s161
      %s163 = sphi 0, %s161
      %s164 = sphi 0, %s163
      %s178 = sphi 0, %s164
      %s182 = sphi 0, %s182
      %s184 = sphi 0, %s182
      %s185 = sphi 0, %s184
      %s199 = sphi 0, %s185
      %s203 = sphi 0, %s203
      %s205 = sphi 0, %s203
      %s206 = sphi 0, %s205
      %s220 = sphi 0, %s206
      %s226 = sphi 0, %s228
      %s229 = sphi 0, %s226
      %s230 = sphi 0, %s229
      %s246 = sphi 0, %s230
      %s252 = sphi 0, %s254
      %s255 = sphi 0, %s252
      %s256 = sphi 0, %s255
      %s272 = sphi 0, %s256
    $region4: #{tabr_forward_batched.1} parent=1 // loop_header_branch
      %25 = sbr.rel (%p23) target = $region8
    $region5: #{tabr_forward_batched.1} parent=1 // loop_body
      %s27 = ssub.s32 %s22, 1
      %s28 = ssub.s32 %s22, 2
      %s29 = sadd.s32 %s22, 1
      %s30 = ssub.s32 %s22, %s29
      %p31 = scmp.eq.s32.totalorder %s30, 0
      %s33 = sadd.s32 %s32, 1
      %s34 = scalar_select %p31, %s32, %s33
      %p37 = pneg %p31
      %p38 = scmp.eq.s32.totalorder %s22, 3
      %p39 = por %p37, %p38
      %p40 = scmp.ne.s32.totalorder %s32, %s35
      %p41 = scmp.eq.s32.totalorder %s22, 0
      %p42 = por %p40, %p41
      %p43 = scmp.ne.s32.totalorder %s32, %s35
      %p44 = scmp.eq.s32.totalorder %s27, 3
      %p45 = por %p43, %p44
      %p46 = scmp.ne.s32.totalorder %s35, %s36
      %p47 = scmp.eq.s32.totalorder %s27, 0
      %p48 = por %p46, %p47
      %p49 = scmp.ne.s32.totalorder %s35, %s36
      %p50 = scmp.eq.s32.totalorder %s28, 3
      %p51 = por %p49, %p50
      %p53 = scmp.ne.s32.totalorder %s36, %s52
      %p54 = scmp.eq.s32.totalorder %s28, 0
      %p55 = por %p53, %p54
      %s57 = sadd.s32 %s56, 1
      %p60 = scmp.eq.s32.totalorder %s22, 3
      %p61 = scmp.ne.s32.totalorder %s56, %s58
      %p62 = scmp.eq.s32.totalorder %s22, 0
      %p63 = por %p61, %p62
      %p64 = scmp.ne.s32.totalorder %s56, %s58
      %p65 = scmp.eq.s32.totalorder %s27, 3
      %p66 = por %p64, %p65
      %p67 = scmp.ne.s32.totalorder %s58, %s59
      %p68 = scmp.eq.s32.totalorder %s27, 0
      %p69 = por %p67, %p68
      %p70 = scmp.ne.s32.totalorder %s58, %s59
      %p71 = scmp.eq.s32.totalorder %s28, 3
      %p72 = por %p70, %p71
      %p74 = scmp.ne.s32.totalorder %s59, %s73
      %p75 = scmp.eq.s32.totalorder %s28, 0
      %p76 = por %p74, %p75
      %s78 = sadd.s32 %s77, 1
      %p81 = scmp.eq.s32.totalorder %s22, 3
      %p82 = scmp.ne.s32.totalorder %s77, %s79
      %p83 = scmp.eq.s32.totalorder %s22, 0
      %p84 = por %p82, %p83
      %p85 = scmp.ne.s32.totalorder %s77, %s79
      %p86 = scmp.eq.s32.totalorder %s27, 3
      %p87 = por %p85, %p86
      %p88 = scmp.ne.s32.totalorder %s79, %s80
      %p89 = scmp.eq.s32.totalorder %s27, 0
      %p90 = por %p88, %p89
      %p91 = scmp.ne.s32.totalorder %s79, %s80
      %p92 = scmp.eq.s32.totalorder %s28, 3
      %p93 = por %p91, %p92
      %p95 = scmp.ne.s32.totalorder %s80, %s94
      %p96 = scmp.eq.s32.totalorder %s28, 0
      %p97 = por %p95, %p96
      %s99 = sadd.s32 %s98, 1
      %p102 = scmp.eq.s32.totalorder %s22, 3
      %p103 = scmp.ne.s32.totalorder %s98, %s100
      %p104 = scmp.eq.s32.totalorder %s22, 0
      %p105 = por %p103, %p104
      %p106 = scmp.ne.s32.totalorder %s98, %s100
      %p107 = scmp.eq.s32.totalorder %s27, 3
      %p108 = por %p106, %p107
      %p109 = scmp.ne.s32.totalorder %s100, %s101
      %p110 = scmp.eq.s32.totalorder %s27, 0
      %p111 = por %p109, %p110
      %p112 = scmp.ne.s32.totalorder %s100, %s101
      %p113 = scmp.eq.s32.totalorder %s28, 3
      %p114 = por %p112, %p113
      %p116 = scmp.ne.s32.totalorder %s101, %s115
      %p117 = scmp.eq.s32.totalorder %s28, 0
      %p118 = por %p116, %p117
      %s120 = sadd.s32 %s119, 1
      %p123 = scmp.eq.s32.totalorder %s22, 3
      %p124 = scmp.ne.s32.totalorder %s119, %s121
      %p125 = scmp.eq.s32.totalorder %s22, 0
      %p126 = por %p124, %p125
      %p127 = scmp.ne.s32.totalorder %s119, %s121
      %p128 = scmp.eq.s32.totalorder %s27, 3
      %p129 = por %p127, %p128
      %p130 = scmp.ne.s32.totalorder %s121, %s122
      %p131 = scmp.eq.s32.totalorder %s27, 0
      %p132 = por %p130, %p131
      %p133 = scmp.ne.s32.totalorder %s121, %s122
      %p134 = scmp.eq.s32.totalorder %s28, 3
      %p135 = por %p133, %p134
      %p137 = scmp.ne.s32.totalorder %s122, %s136
      %p138 = scmp.eq.s32.totalorder %s28, 0
      %p139 = por %p137, %p138
      %s141 = sadd.s32 %s140, 1
      %p144 = scmp.eq.s32.totalorder %s22, 3
      %p145 = scmp.ne.s32.totalorder %s140, %s142
      %p146 = scmp.eq.s32.totalorder %s22, 0
      %p147 = por %p145, %p146
      %p148 = scmp.ne.s32.totalorder %s140, %s142
      %p149 = scmp.eq.s32.totalorder %s27, 3
      %p150 = por %p148, %p149
      %p151 = scmp.ne.s32.totalorder %s142, %s143
      %p152 = scmp.eq.s32.totalorder %s27, 0
      %p153 = por %p151, %p152
      %p154 = scmp.ne.s32.totalorder %s142, %s143
      %p155 = scmp.eq.s32.totalorder %s28, 3
      %p156 = por %p154, %p155
      %p158 = scmp.ne.s32.totalorder %s143, %s157
      %p159 = scmp.eq.s32.totalorder %s28, 0
      %p160 = por %p158, %p159
      %s162 = sadd.s32 %s161, 1
      %p165 = scmp.eq.s32.totalorder %s22, 3
      %p166 = scmp.ne.s32.totalorder %s161, %s163
      %p167 = scmp.eq.s32.totalorder %s22, 0
      %p168 = por %p166, %p167
      %p169 = scmp.ne.s32.totalorder %s161, %s163
      %p170 = scmp.eq.s32.totalorder %s27, 3
      %p171 = por %p169, %p170
      %p172 = scmp.ne.s32.totalorder %s163, %s164
      %p173 = scmp.eq.s32.totalorder %s27, 0
      %p174 = por %p172, %p173
      %p175 = scmp.ne.s32.totalorder %s163, %s164
      %p176 = scmp.eq.s32.totalorder %s28, 3
      %p177 = por %p175, %p176
      %p179 = scmp.ne.s32.totalorder %s164, %s178
      %p180 = scmp.eq.s32.totalorder %s28, 0
      %p181 = por %p179, %p180
      %s183 = sadd.s32 %s182, 1
      %p186 = scmp.eq.s32.totalorder %s22, 3
      %p187 = scmp.ne.s32.totalorder %s182, %s184
      %p188 = scmp.eq.s32.totalorder %s22, 0
      %p189 = por %p187, %p188
      %p190 = scmp.ne.s32.totalorder %s182, %s184
      %p191 = scmp.eq.s32.totalorder %s27, 3
      %p192 = por %p190, %p191
      %p193 = scmp.ne.s32.totalorder %s184, %s185
      %p194 = scmp.eq.s32.totalorder %s27, 0
      %p195 = por %p193, %p194
      %p196 = scmp.ne.s32.totalorder %s184, %s185
      %p197 = scmp.eq.s32.totalorder %s28, 3
      %p198 = por %p196, %p197
      %p200 = scmp.ne.s32.totalorder %s185, %s199
      %p201 = scmp.eq.s32.totalorder %s28, 0
      %p202 = por %p200, %p201
      %s204 = sadd.s32 %s203, 1
      %p207 = scmp.eq.s32.totalorder %s22, 3
      %p208 = scmp.ne.s32.totalorder %s203, %s205
      %p209 = scmp.eq.s32.totalorder %s22, 0
      %p210 = por %p208, %p209
      %p211 = scmp.ne.s32.totalorder %s203, %s205
      %p212 = scmp.eq.s32.totalorder %s27, 3
      %p213 = por %p211, %p212
      %p214 = scmp.ne.s32.totalorder %s205, %s206
      %p215 = scmp.eq.s32.totalorder %s27, 0
      %p216 = por %p214, %p215
      %p217 = scmp.ne.s32.totalorder %s205, %s206
      %p218 = scmp.eq.s32.totalorder %s28, 3
      %p219 = por %p217, %p218
      %p221 = scmp.ne.s32.totalorder %s206, %s220
      %p222 = scmp.eq.s32.totalorder %s28, 0
      %p223 = por %p221, %p222
      %s224 = ssub.s32 %s22, %s29
      %p225 = scmp.eq.s32.totalorder %s224, 0
      %s227 = sadd.s32 %s226, 1
      %s228 = scalar_select %p225, %s226, %s227
      %p231 = pneg %p225
      %p232 = scmp.eq.s32.totalorder %s22, 3
      %p233 = por %p231, %p232
      %p234 = scmp.ne.s32.totalorder %s226, %s229
      %p235 = scmp.eq.s32.totalorder %s22, 0
      %p236 = por %p234, %p235
      %p237 = scmp.ne.s32.totalorder %s226, %s229
      %p238 = scmp.eq.s32.totalorder %s27, 3
      %p239 = por %p237, %p238
      %p240 = scmp.ne.s32.totalorder %s229, %s230
      %p241 = scmp.eq.s32.totalorder %s27, 0
      %p242 = por %p240, %p241
      %p243 = scmp.ne.s32.totalorder %s229, %s230
      %p244 = scmp.eq.s32.totalorder %s28, 3
      %p245 = por %p243, %p244
      %p247 = scmp.ne.s32.totalorder %s230, %s246
      %p248 = scmp.eq.s32.totalorder %s28, 0
      %p249 = por %p247, %p248
      %s250 = ssub.s32 %s22, %s29
      %p251 = scmp.eq.s32.totalorder %s250, 0
      %s253 = sadd.s32 %s252, 1
      %s254 = scalar_select %p251, %s252, %s253
      %p257 = pneg %p251
      %p258 = scmp.eq.s32.totalorder %s22, 3
      %p259 = por %p257, %p258
      %p260 = scmp.ne.s32.totalorder %s252, %s255
      %p261 = scmp.eq.s32.totalorder %s22, 0
      %p262 = por %p260, %p261
      %p263 = scmp.ne.s32.totalorder %s252, %s255
      %p264 = scmp.eq.s32.totalorder %s27, 3
      %p265 = por %p263, %p264
      %p266 = scmp.ne.s32.totalorder %s255, %s256
      %p267 = scmp.eq.s32.totalorder %s27, 0
      %p268 = por %p266, %p267
      %p269 = scmp.ne.s32.totalorder %s255, %s256
      %p270 = scmp.eq.s32.totalorder %s28, 3
      %p271 = por %p269, %p270
      %p273 = scmp.ne.s32.totalorder %s256, %s272
      %p274 = scmp.eq.s32.totalorder %s28, 0
      %p275 = por %p273, %p274
      %p276 = scmp.le.s32.totalorder 1, %s22
      %p277 = scmp.lt.s32.totalorder %s22, 5
      %p278 = pnand %p276, %p277
      %p279 = pneg %p278
      // Predicated region
      $region9: #{tabr_forward_batched.1} parent=5 // pred_check
        _
      $region10: #{tabr_forward_batched.1} parent=5 // pred_check_branch
        %281 = sbr.rel (%p278) target = $region12
      $region11: #{tabr_forward_batched.1} parent=5 // pred_region
        %s282 = ssub.s32 %s22, 1
        // Predicated region
        $region13: #{tabr_forward_batched.1} parent=11 // pred_check
          %p283 = pneg %p69
        $region14: #{tabr_forward_batched.1} parent=11 // pred_check_branch
          %285 = sbr.rel (%p283) target = $region16
        $region15: #{tabr_forward_batched.1} parent=11 // pred_region
          _
        $region16: #{tabr_forward_batched.1} parent=11 // pred_fallthru
          _
        // Predicated region
        $region17: #{tabr_forward_batched.1} parent=11 // pred_check
          %p286 = pneg %p90
        $region18: #{tabr_forward_batched.1} parent=11 // pred_check_branch
          %288 = sbr.rel (%p286) target = $region20
        $region19: #{tabr_forward_batched.1} parent=11 // pred_region
          _
        $region20: #{tabr_forward_batched.1} parent=11 // pred_fallthru
          _
        // Predicated region
        $region21: #{tabr_forward_batched.1} parent=11 // pred_check
          %p289 = pneg %p111
        $region22: #{tabr_forward_batched.1} parent=11 // pred_check_branch
          %291 = sbr.rel (%p289) target = $region24
        $region23: #{tabr_forward_batched.1} parent=11 // pred_region
          _
        $region24: #{tabr_forward_batched.1} parent=11 // pred_fallthru
          _
        // Predicated region
        $region25: #{tabr_forward_batched.1} parent=11 // pred_check
          %p292 = pneg %p132
        $region26: #{tabr_forward_batched.1} parent=11 // pred_check_branch
          %294 = sbr.rel (%p292) target = $region28
        $region27: #{tabr_forward_batched.1} parent=11 // pred_region
          _
        $region28: #{tabr_forward_batched.1} parent=11 // pred_fallthru
          _
        // Predicated region
        $region29: #{tabr_forward_batched.1} parent=11 // pred_check
          %p295 = pneg %p153
        $region30: #{tabr_forward_batched.1} parent=11 // pred_check_branch
          %297 = sbr.rel (%p295) target = $region32
        $region31: #{tabr_forward_batched.1} parent=11 // pred_region
          _
        $region32: #{tabr_forward_batched.1} parent=11 // pred_fallthru
          _
        // Predicated region
        $region33: #{tabr_forward_batched.1} parent=11 // pred_check
          %p298 = pneg %p174
        $region34: #{tabr_forward_batched.1} parent=11 // pred_check_branch
          %300 = sbr.rel (%p298) target = $region36
        $region35: #{tabr_forward_batched.1} parent=11 // pred_region
          _
        $region36: #{tabr_forward_batched.1} parent=11 // pred_fallthru
          _
        // Predicated region
        $region37: #{tabr_forward_batched.1} parent=11 // pred_check
          %p301 = pneg %p195
        $region38: #{tabr_forward_batched.1} parent=11 // pred_check_branch
          %303 = sbr.rel (%p301) target = $region40
        $region39: #{tabr_forward_batched.1} parent=11 // pred_region
          _
        $region40: #{tabr_forward_batched.1} parent=11 // pred_fallthru
          _
        // Predicated region
        $region41: #{tabr_forward_batched.1} parent=11 // pred_check
          %p304 = pneg %p216
        $region42: #{tabr_forward_batched.1} parent=11 // pred_check_branch
          %306 = sbr.rel (%p304) target = $region44
        $region43: #{tabr_forward_batched.1} parent=11 // pred_region
          _
        $region44: #{tabr_forward_batched.1} parent=11 // pred_fallthru
          _
      $region12: #{tabr_forward_batched.1} parent=5 // pred_fallthru
        _
      %p307 = scmp.lt.s32.totalorder %s22, 4
      // Predicated region
      $region45: #{tabr_forward_batched.1} parent=5 // pred_check
        %p308 = pneg %p307
      $region46: #{tabr_forward_batched.1} parent=5 // pred_check_branch
        %310 = sbr.rel (%p308) target = $region48
      $region47: #{tabr_forward_batched.1} parent=5 // pred_region
        // Predicated region
        $region49: #{tabr_forward_batched.1} parent=47 // pred_check
          %p311 = pneg %p42
        $region50: #{tabr_forward_batched.1} parent=47 // pred_check_branch
          %313 = sbr.rel (%p311) target = $region52
        $region51: #{tabr_forward_batched.1} parent=47 // pred_region
          %p314 = scmp.lt.s32.totalorder %s22, 3
          %s315 = scalar_select %p314, %s22, 3
          %s316 = smul.addr %s315, 8
          %s317 = scalar_lea.vmem %s0, %s316
        $region52: #{tabr_forward_batched.1} parent=47 // pred_fallthru
          _
      $region48: #{tabr_forward_batched.1} parent=5 // pred_fallthru
        _
      %p318 = scmp.le.s32.totalorder 1, %s22
      %p319 = scmp.lt.s32.totalorder %s22, 5
      %p320 = pnand %p318, %p319
      %p321 = pneg %p320
      // Predicated region
      $region53: #{tabr_forward_batched.1} parent=5 // pred_check
        _
      $region54: #{tabr_forward_batched.1} parent=5 // pred_check_branch
        %323 = sbr.rel (%p320) target = $region56
      $region55: #{tabr_forward_batched.1} parent=5 // pred_region
        %s324 = ssub.s32 %s22, 1
        %p325 = scmp.lt.s32.totalorder %s27, 3
        %s326 = scalar_select %p325, %s27, 3
        %s327 = smul.addr %s326, 8
        %s328 = scalar_lea.vmem %s0, %s327
        %p329 = pneg %p48
        %p330 = pneg %p45
        %p331 = pneg %p69
        %p332 = pneg %p66
        %p333 = pneg %p90
        %p334 = pneg %p87
        %p335 = pneg %p111
        %p336 = pneg %p108
        %p337 = pneg %p132
        %p338 = pneg %p129
        %p339 = pneg %p153
        %p340 = pneg %p150
        %p341 = pneg %p174
        %p342 = pneg %p171
        %p343 = pneg %p195
        %p344 = pneg %p192
        %p345 = pneg %p216
        %p346 = pneg %p213
        %p347 = pneg %p242
        %p348 = pneg %p239
        %p349 = scmp.lt.s32.totalorder %s27, 3
        %s350 = scalar_select %p349, %s27, 3
        %s351 = scalar_lea.vmem %s9, %s350
        %p352 = pneg %p268
        %p353 = pneg %p265
        %s354 = sand.u32 %s255, 1
        %s355 = scalar_lea.sflag [#allocation4], %s354
        %s356 = sand.u32 %s255, 1
        %s357 = scalar_lea.vmem [#allocation3], %s356
        %p358 = scmp.lt.s32.totalorder %s27, 3
        %s359 = scalar_select %p358, %s27, 3
        %s360 = smul.addr %s359, 8
        %s361 = scalar_lea.vmem %s0, %s360
        %p362 = scmp.lt.s32.totalorder %s27, 3
        %s363 = scalar_select %p362, %s27, 3
        %s364 = scalar_lea.vmem %s9, %s363
        %v365 = vld [vmem:[%s361] sm:$0xff]
        %v366 = vld [vmem:[%s1] sm:$0xff]
        %v367 = vld [vmem:[%s1 + $0x8] sm:$0xff]
        %v368 = vld [vmem:[%s1 + $0x10] sm:$0xff]
        %v369 = vld [vmem:[%s1 + $0x18] sm:$0xff]
        %v370 = vld [vmem:[%s2] sm:$0x1]
        %v372 = vperm.slane %v370, 0
        %vm374 = vcmask 261120
        %v376 = vsel %vm374, %v365, 0
        %378 = vmatpush.msra.mxu0 0.0
        %379 = vmatpush.msra.mxu0 0.0
        %380 = vmatpush.msra.mxu0 0.0
        %381 = vmatpush.msra.mxu0 0.0
        %382 = vmatpush.msra.mxu0 0.0
        %383 = vmatpush.msra.mxu0 0.0
        %384 = vmatpush.msra.mxu0 0.0
        %385 = vmatpush.msra.mxu0 0.0
        %386 = vmatpush.msra.mxu0 0.0
        %387 = vmatpush.msra.mxu0 0.0
        %388 = vmatpush.msra.mxu0 0.0
        %389 = vmatpush.msra.mxu0 0.0
        %390 = vmatpush.msra.mxu0 %v369
        %391 = vmatpush.msra.mxu0 %v368
        %392 = vmatpush.msra.mxu0 %v367
        %393 = vmatpush.msra.mxu0 %v366
        %394 = vmatmul.f32.gmra.mxu0 %v376
        %v395 = vpop.f32.mrf.mxu0
        %v396 = vadd.f32 %v372, %v395
        %397 = vdwg.mxu0
        %v398 = vmax.f32 %v396, 0.0
        %v399 = vld [vmem:[%s3] sm:$0x1]
        %v400 = vld [vmem:[#allocation2] sm:$0x1]
        %402 = vset.pattern.permute.xlu0 0
        %403 = vperm.xlu0 %402, %v400
        %v404 = vpop.permute.xlu0 %403
        %v406 = vperm.slane %v404, 0
        %vm407 = vcmask 130048
        %v409 = vsel %vm407, %v399, 0
        %v412 = vsel %vm407, %v398, 0
        %414 = vmatpush.xpose.msra.mxu0 0.0
        %415 = vmatpush.xpose.msra.mxu0 0.0
        %416 = vmatpush.xpose.msra.mxu0 0.0
        %417 = vmatpush.xpose.msra.mxu0 0.0
        %418 = vmatpush.xpose.msra.mxu0 0.0
        %419 = vmatpush.xpose.msra.mxu0 0.0
        %420 = vmatpush.xpose.msra.mxu0 0.0
        %421 = vmatpush.xpose.msra.mxu0 0.0
        %422 = vmatpush.xpose.msra.mxu0 0.0
        %423 = vmatpush.xpose.msra.mxu0 0.0
        %424 = vmatpush.xpose.msra.mxu0 0.0
        %425 = vmatpush.xpose.msra.mxu0 0.0
        %426 = vmatpush.xpose.msra.mxu0 0.0
        %427 = vmatpush.xpose.msra.mxu0 0.0
        %428 = vmatpush.xpose.msra.mxu0 0.0
        %429 = vmatpush.xpose.msra.mxu0 %v412
        %430 = vmatmul.f32.gmra.mxu0 %v409
        %v431 = vpop.f32.mrf.mxu0
        %v432 = vadd.f32 %v406, %v431
        %433 = vdwg.mxu0
        %vm434 = vcmask 57344
        %435 = vst.msk [vmem:[%s357] sm:$0x1] %vm434, %v432
        %v436 = vsel %vm434, %v432, -inf
        %437 = vmax.xlane.f32.xlu0 %v436
        %v438 = vpop.xlane.xlu0 %437
        %v439 = vsub.f32 %v432, %v438
        %v440 = vmul.f32 %v439, 1.442695
        %v441 = vpow.pop %v440
        %v442 = vsel %vm434, %v441, 0.0
        %443 = vadd.xlane.f32.xlu0 %v442
        %v444 = vpop.xlane.xlu0 %443
        %vm445 = vcmask 64512
        %v447 = vsel %vm445, %v441, 0
        %449 = vmatpush.msra.mxu0 0.0
        %450 = vmatpush.msra.mxu0 0.0
        %451 = vmatpush.msra.mxu0 0.0
        %452 = vmatpush.msra.mxu0 0.0
        %453 = vmatpush.msra.mxu0 0.0
        %454 = vmatpush.msra.mxu0 0.0
        %455 = vmatpush.msra.mxu0 0.0
        %456 = vmatpush.msra.mxu0 0.0
        %457 = vmatpush.msra.mxu0 0.0
        %458 = vmatpush.msra.mxu0 0.0
        %459 = vmatpush.msra.mxu0 0.0
        %460 = vmatpush.msra.mxu0 0.0
        %461 = vmatpush.msra.mxu0 0.0
        %462 = vmatpush.msra.mxu0 0.0
        %463 = vmatpush.msra.mxu0 0.0
        %464 = vmatpush.msra.mxu0 %v365
        %465 = vmatmul.f32.gmra.mxu0 %v447
        %v466 = vpop.f32.mrf.mxu0
        %v467 = vadd.f32 0.0, %v466
        %468 = vdwg.mxu0
        %v469 = vrcp.pop %v444
        %v470 = vmul.f32 %v467, %v469
        %v471 = vld [vmem:[%s5] sm:$0xff]
        %v472 = vld [vmem:[%s5 + $0x8] sm:$0xff]
        %v473 = vld [vmem:[%s5 + $0x10] sm:$0xff]
        %v474 = vld [vmem:[%s5 + $0x18] sm:$0xff]
        %v475 = vld [vmem:[%s6] sm:$0x1]
        %v477 = vsel %vm374, %v470, 0
        %479 = vmatpush.msra.mxu0 0.0
        %480 = vmatpush.msra.mxu0 0.0
        %481 = vmatpush.msra.mxu0 0.0
        %482 = vmatpush.msra.mxu0 0.0
        %483 = vmatpush.msra.mxu0 0.0
        %484 = vmatpush.msra.mxu0 0.0
        %485 = vmatpush.msra.mxu0 0.0
        %486 = vmatpush.msra.mxu0 0.0
        %487 = vmatpush.msra.mxu0 0.0
        %488 = vmatpush.msra.mxu0 0.0
        %489 = vmatpush.msra.mxu0 0.0
        %490 = vmatpush.msra.mxu0 0.0
        %491 = vmatpush.msra.mxu0 %v474
        %492 = vmatpush.msra.mxu0 %v473
        %493 = vmatpush.msra.mxu0 %v472
        %494 = vmatpush.msra.mxu0 %v471
        %495 = vmatmul.f32.gmra.mxu0 %v477
        %v496 = vpop.f32.mrf.mxu0
        %v497 = vadd.f32 %v475, %v496
        %498 = vdwg.mxu0
        %v499 = vmax.f32 %v497, 0.0
        %v500 = vld [vmem:[%s7] sm:$0xff]
        %v501 = vld [vmem:[%s7 + $0x8] sm:$0xff]
        %v502 = vld [vmem:[%s7 + $0x10] sm:$0xff]
        %v503 = vld [vmem:[%s7 + $0x18] sm:$0xff]
        %v504 = vld [vmem:[%s8] sm:$0x1]
        %v506 = vsel %vm374, %v499, 0
        %508 = vmatpush.msra.mxu0 0.0
        %509 = vmatpush.msra.mxu0 0.0
        %510 = vmatpush.msra.mxu0 0.0
        %511 = vmatpush.msra.mxu0 0.0
        %512 = vmatpush.msra.mxu0 0.0
        %513 = vmatpush.msra.mxu0 0.0
        %514 = vmatpush.msra.mxu0 0.0
        %515 = vmatpush.msra.mxu0 0.0
        %516 = vmatpush.msra.mxu0 0.0
        %517 = vmatpush.msra.mxu0 0.0
        %518 = vmatpush.msra.mxu0 0.0
        %519 = vmatpush.msra.mxu0 0.0
        %520 = vmatpush.msra.mxu0 %v503
        %521 = vmatpush.msra.mxu0 %v502
        %522 = vmatpush.msra.mxu0 %v501
        %523 = vmatpush.msra.mxu0 %v500
        %524 = vmatmul.f32.gmra.mxu0 %v506
        %v525 = vpop.f32.mrf.mxu0
        %v526 = vadd.f32 %v504, %v525
        %527 = vdwg.mxu0
        %vm528 = vcmask 8192
        %529 = vst.msk [vmem:[%s364] sm:$0x1] %vm528, %v526
        %p530 = scmp.lt.s32.totalorder %s27, 3
        %s531 = scalar_select %p530, %s27, 3
        %s532 = scalar_lea.vmem %s9, %s531
        %s533 = sand.u32 %s255, 1
        %s534 = scalar_lea.sflag [#allocation4], %s533
        %s535 = sand.u32 %s255, 1
        %s536 = scalar_lea.vmem [#allocation3], %s535
        // Predicated region
        $region57: #{tabr_forward_batched.1} parent=55 // pred_check
          %p537 = pneg %p239
        $region58: #{tabr_forward_batched.1} parent=55 // pred_check_branch
          %539 = sbr.rel (%p537) target = $region60
        $region59: #{tabr_forward_batched.1} parent=55 // pred_region
          _
        $region60: #{tabr_forward_batched.1} parent=55 // pred_fallthru
          _
        // Predicated region
        $region61: #{tabr_forward_batched.1} parent=55 // pred_check
          %p540 = pneg %p265
        $region62: #{tabr_forward_batched.1} parent=55 // pred_check_branch
          %542 = sbr.rel (%p540) target = $region64
        $region63: #{tabr_forward_batched.1} parent=55 // pred_region
          %544 = vsyncadd %s534, 0
          %s545 = scalar_lea.hbm %s10, %s27
          %s547 = sshll.u32 %s536, 4
          %s548 = int_to_ptr.vmem [resolvable:$true] %s547
          %s549 = sshll.u32 %s545, 4
          %s550 = int_to_ptr.hbm [resolvable:$true] %s549
          %552 = dma.vmem_to_hbm [thread:$0]  %s548, 16, %s550, %s534
        $region64: #{tabr_forward_batched.1} parent=55 // pred_fallthru
          _
      $region56: #{tabr_forward_batched.1} parent=5 // pred_fallthru
        _
      %p553 = scmp.le.s32.totalorder 2, %s22
      // Predicated region
      $region65: #{tabr_forward_batched.1} parent=5 // pred_check
        %p554 = pneg %p553
      $region66: #{tabr_forward_batched.1} parent=5 // pred_check_branch
        %556 = sbr.rel (%p554) target = $region68
      $region67: #{tabr_forward_batched.1} parent=5 // pred_region
        %s557 = ssub.s32 %s22, 2
        // Predicated region
        $region69: #{tabr_forward_batched.1} parent=67 // pred_check
          %p558 = pneg %p245
        $region70: #{tabr_forward_batched.1} parent=67 // pred_check_branch
          %560 = sbr.rel (%p558) target = $region72
        $region71: #{tabr_forward_batched.1} parent=67 // pred_region
          %p561 = scmp.lt.s32.totalorder %s28, 3
          %s562 = scalar_select %p561, %s28, 3
          %s563 = scalar_lea.vmem %s9, %s562
        $region72: #{tabr_forward_batched.1} parent=67 // pred_fallthru
          _
        // Predicated region
        $region73: #{tabr_forward_batched.1} parent=67 // pred_check
          %p564 = pneg %p271
        $region74: #{tabr_forward_batched.1} parent=67 // pred_check_branch
          %566 = sbr.rel (%p564) target = $region76
        $region75: #{tabr_forward_batched.1} parent=67 // pred_region
          %s567 = sand.u32 %s256, 1
          %s568 = scalar_lea.sflag [#allocation4], %s567
          %s569 = sand.u32 %s256, 1
          %s570 = scalar_lea.vmem [#allocation3], %s569
          %572 = dma.done %s568, 16
        $region76: #{tabr_forward_batched.1} parent=67 // pred_fallthru
          _
      $region68: #{tabr_forward_batched.1} parent=5 // pred_fallthru
        _
    $region6: #{tabr_forward_batched.1} parent=1 // loop_footer
      %s26 = sadd.s32 1, %s22
    $region7: #{tabr_forward_batched.1} parent=1 // loop_footer_branch
      %21 = sbr.rel target = $region3
    $region8: #{tabr_forward_batched.1} parent=1 // loop_exit
      _
    %573 = vsyncpa [#allocation4], 1
    %s574 = scalar_lea.sflag [#allocation4], 1
    %575 = vsyncpa %s574, 1

</llo_original>
